<compile_context>
chip_gen: v7x
topology: tpu7x:2x2x1
jax: 0.10.0
libtpu: 0.0.40
codegen_flags: <defaults>
</compile_context>

<pallas_src>
import jax
import jax.numpy as jnp
from jax.experimental import pallas as pl
from jax.experimental.pallas import tpu as pltpu

# ---- model dims (small, consistent with the forward) ----
N = 8          # batch
S_TXT = 8      # text sequence length
L_LAB = 4      # number of label attributes
R_IMG = 8      # image regions
F_IMG = 16     # raw image-region feature dim
D = 32         # hidden feature dim of all sequences
VOCAB = 50
LAB_VOCAB = 10
R_RANK = 4     # low-rank fusion rank  (R in __LWFusion)
HID = 128      # output fusion dim     (h in __LWFusion)
RH = R_RANK * HID


# -------------------------- Pallas kernel --------------------------
def _lwf_kernel(img_ref, txt_ref, lab_ref,
                wa_img_ref, wa_txt_ref, wb_ref, wc_ref,
                wa_b_ref, wb_b_ref, wc_b_ref, bias_ref, out_ref):
    # bf16 inputs for the MXU, f32 accumulation; elementwise work stays f32.
    img = img_ref[...].astype(jnp.bfloat16)   # (N, F_IMG)  raw per-region image mean
    txt = txt_ref[...].astype(jnp.bfloat16)   # (N, D)      text sequence mean
    lab = lab_ref[...].astype(jnp.bfloat16)   # (N, D)      label sequence mean

    # fi corresponds to cat([mean(final_fusion), 1]) @ Wa[r] for all ranks at once:
    #   the concat-mean (alpha/beta), img_proj and Wf are all folded into
    #   wa_img / wa_txt / wa_bias at parameter-prep time.
    fi = (jnp.dot(img, wa_img_ref[...], preferred_element_type=jnp.float32)
          + jnp.dot(txt, wa_txt_ref[...], preferred_element_type=jnp.float32)
          + wa_b_ref[...])                                                 # (N, R*H)
    ft = jnp.dot(txt, wb_ref[...], preferred_element_type=jnp.float32) + wb_b_ref[...]
    fl = jnp.dot(lab, wc_ref[...], preferred_element_type=jnp.float32) + wc_b_ref[...]

    prod = fi * ft * fl                       # (N, R*H); Wf already folded into fi

    # matmul(Wf, fusion.permute(1,0,2)).squeeze() == sum over rank blocks
    # (4 lane-aligned 128-wide slices of the same vregs -> pure VPU adds).
    acc = prod[:, 0:HID]
    for r in range(1, R_RANK):                # static unroll, R_RANK = 4
        acc = acc + prod[:, r * HID:(r + 1) * HID]

    out = acc + bias_ref[...]                                 # (N, HID) + (1, HID)
    out_ref[...] = jnp.where(jnp.isnan(out), jnp.zeros_like(out), out)


def lwf_fusion(img_mean_raw, text_mean, label_mean, packed):
    n = img_mean_raw.shape[0]
    vmem = pl.BlockSpec(memory_space=pltpu.MemorySpace.VMEM)
    return pl.pallas_call(
        _lwf_kernel,
        out_shape=jax.ShapeDtypeStruct((n, HID), jnp.float32),
        in_specs=[vmem] * 11,
        out_specs=vmem,
    )(img_mean_raw, text_mean, label_mean,
      packed["wa_img"], packed["wa_txt"], packed["wb"], packed["wc"],
      packed["wa_bias"], packed["wb_bias"], packed["wc_bias"], packed["bias"])


# -------------------------- parameters (deterministic) --------------------------
def init_params(key):
    ks = jax.random.split(key, 8)
    scale = 0.02
    return {
        "tok_emb":   scale * jax.random.normal(ks[0], (VOCAB, D), jnp.float32),
        "label_emb": scale * jax.random.normal(ks[1], (LAB_VOCAB, D), jnp.float32),
        "img_proj":  scale * jax.random.normal(ks[2], (F_IMG, D), jnp.float32),
        # LWF parameters (torch layout: (R, d+1, h) etc.), initialized deterministically.
        "Wa":   scale * jax.random.normal(ks[3], (R_RANK, D + 1, HID), jnp.float32),
        "Wb":   scale * jax.random.normal(ks[4], (R_RANK, D + 1, HID), jnp.float32),
        "Wc":   scale * jax.random.normal(ks[5], (R_RANK, D + 1, HID), jnp.float32),
        "Wf":   scale * jax.random.normal(ks[6], (1, R_RANK), jnp.float32),
        "bias": scale * jax.random.normal(ks[7], (1, HID), jnp.float32),
    }


def pack_lwf_params(params):
    """One-time repack of the torch-layout LWF weights into lane-dense kernel weights."""
    wf = params["Wf"][0]                       # (R,)
    wf_lanes = jnp.repeat(wf, HID)[None, :]    # (1, R*H): per-rank 128-wide lane blocks

    def pack_mat(w):        # (R, D+1, H) -> (D, R*H), rank-major lane blocks
        return jnp.transpose(w[:, :D, :], (1, 0, 2)).reshape(D, RH)

    def pack_ones_row(w):   # the "ones column" coefficient row -> (1, R*H)
        return w[:, D, :].reshape(1, RH)

    # mean(concat([img_seq, text_seq], dim=1)) = alpha*mean(img_seq) + beta*mean(text_seq)
    alpha = R_IMG / float(R_IMG + S_TXT)
    beta = S_TXT / float(R_IMG + S_TXT)

    wa_mat = pack_mat(params["Wa"]) * wf_lanes           # Wf folded into Wa
    wa_bias = pack_ones_row(params["Wa"]) * wf_lanes     # (added BEFORE the 3-way product)
    wb_mat, wb_bias = pack_mat(params["Wb"]), pack_ones_row(params["Wb"])
    wc_mat, wc_bias = pack_mat(params["Wc"]), pack_ones_row(params["Wc"])

    return {
        # mean-over-regions commutes with img_proj, so fold img_proj (and alpha) here.
        "wa_img": (alpha * (params["img_proj"] @ wa_mat)).astype(jnp.bfloat16),  # (F_IMG, R*H)
        "wa_txt": (beta * wa_mat).astype(jnp.bfloat16),                          # (D, R*H)
        "wb": wb_mat.astype(jnp.bfloat16),                                       # (D, R*H)
        "wc": wc_mat.astype(jnp.bfloat16),                                       # (D, R*H)
        "wa_bias": wa_bias.astype(jnp.float32),                                  # (1, R*H)
        "wb_bias": wb_bias.astype(jnp.float32),
        "wc_bias": wc_bias.astype(jnp.float32),
        "bias": params["bias"].astype(jnp.float32),                              # (1, H)
    }


# -------------------------- forward (glue in plain JAX, hot path in Pallas) ------
def later_fusion_forward(params, packed, label, input_ids, atten_mask,
                         token_type_ids, image_feature):
    # ExtractAttributeFeature (synthetic): label embedding lookup + __dealPara mean.
    label_embeded = params["label_emb"][label]                       # (N, L_LAB, D)
    label_mean = jnp.mean(label_embeded, axis=1)                     # (N, D)

    # ButtomFusion (synthetic): masked token embeddings ("fst_fusion").
    # token_type_ids is accepted for interface parity; unused in the synthetic stub.
    text_seq = params["tok_emb"][input_ids] * atten_mask[..., None]  # (N, S_TXT, D)
    # __dealPara: literal torch mean(dim=1) over the masked embeddings (divides by
    # S_TXT, not sum(mask)), matching the reference module's semantics.
    text_mean = jnp.mean(text_seq, axis=1)                           # (N, D)

    # __dealImage + __dealPara on final_fusion = concat([img_seq, text_seq], dim=1):
    # the per-region mean commutes with transpose + img_proj, and the concat-mean
    # weighting plus img_proj are folded into the packed Wa weights, so only the raw
    # (N, F_IMG) region-mean is needed here (no (N, R_IMG, D) / concat intermediates).
    img_mean_raw = jnp.mean(image_feature, axis=2)                   # (N, F_IMG)

    # LWF low-rank fusion: Pallas kernel.
    all_future = lwf_fusion(img_mean_raw, text_mean, label_mean, packed)  # (N, HID)
    future_dim = all_future.shape[1]
    return all_future, future_dim


# -------------------------- main --------------------------
if __name__ == "__main__":
    key = jax.random.PRNGKey(0)
    kp, k1, k2, k3 = jax.random.split(key, 4)
    params = init_params(kp)
    packed = pack_lwf_params(params)

    label = jax.random.randint(k1, (N, L_LAB), 0, LAB_VOCAB, dtype=jnp.int32)
    input_ids = jax.random.randint(k2, (N, S_TXT), 0, VOCAB, dtype=jnp.int32)
    atten_mask = jnp.ones((N, S_TXT), jnp.float32)
    token_type_ids = jnp.zeros((N, S_TXT), jnp.int32)
    image_feature = jax.random.normal(k3, (N, F_IMG, R_IMG), jnp.float32)

    all_future, future_dim = later_fusion_forward(
        params, packed, label, input_ids, atten_mask, token_type_ids, image_feature)
    jax.block_until_ready(all_future)

    assert all_future.shape == (N, HID)
    assert future_dim == HID
    assert not bool(jnp.any(jnp.isnan(all_future)))
    print("KERNEL_OK")
</pallas_src>

<mosaic_0001>
module attributes {stable_mosaic.version = 11 : i64} {
  func.func @_lwf_kernel(%arg0: memref<8x16xf32, #tpu.memory_space<vmem>>, %arg1: memref<8x32xf32, #tpu.memory_space<vmem>>, %arg2: memref<8x32xf32, #tpu.memory_space<vmem>>, %arg3: memref<16x512xbf16, #tpu.memory_space<vmem>>, %arg4: memref<32x512xbf16, #tpu.memory_space<vmem>>, %arg5: memref<32x512xbf16, #tpu.memory_space<vmem>>, %arg6: memref<32x512xbf16, #tpu.memory_space<vmem>>, %arg7: memref<1x512xf32, #tpu.memory_space<vmem>>, %arg8: memref<1x512xf32, #tpu.memory_space<vmem>>, %arg9: memref<1x512xf32, #tpu.memory_space<vmem>>, %arg10: memref<1x128xf32, #tpu.memory_space<vmem>>, %arg11: memref<8x128xf32, #tpu.memory_space<vmem>>) attributes {dimension_semantics = [], scalar_prefetch = 0 : i64, scratch_operands = 0 : i64, tpu.core_type = #tpu.core_type<tc>} {
    %c0 = arith.constant 0 : index
    %c0_0 = arith.constant 0 : index
    %0 = vector.load %arg0[%c0, %c0_0] : memref<8x16xf32, #tpu.memory_space<vmem>>, vector<8x16xf32>
    %1 = arith.truncf %0 : vector<8x16xf32> to vector<8x16xbf16>
    %c0_1 = arith.constant 0 : index
    %c0_2 = arith.constant 0 : index
    %2 = vector.load %arg1[%c0_1, %c0_2] : memref<8x32xf32, #tpu.memory_space<vmem>>, vector<8x32xf32>
    %3 = arith.truncf %2 : vector<8x32xf32> to vector<8x32xbf16>
    %c0_3 = arith.constant 0 : index
    %c0_4 = arith.constant 0 : index
    %4 = vector.load %arg2[%c0_3, %c0_4] : memref<8x32xf32, #tpu.memory_space<vmem>>, vector<8x32xf32>
    %5 = arith.truncf %4 : vector<8x32xf32> to vector<8x32xbf16>
    %c0_5 = arith.constant 0 : index
    %c0_6 = arith.constant 0 : index
    %6 = vector.load %arg3[%c0_5, %c0_6] : memref<16x512xbf16, #tpu.memory_space<vmem>>, vector<16x512xbf16>
    %cst = arith.constant dense<0.000000e+00> : vector<8x512xf32>
    %7 = tpu.matmul %1, %6, %cst {dimension_numbers = #tpu.dot_dimension_numbers<[1], [0], [0], [1], [0, 0, 1, 1], [], []>} : vector<8x16xbf16>, vector<16x512xbf16>, vector<8x512xf32> -> vector<8x512xf32>
    %c0_7 = arith.constant 0 : index
    %c0_8 = arith.constant 0 : index
    %8 = vector.load %arg4[%c0_7, %c0_8] : memref<32x512xbf16, #tpu.memory_space<vmem>>, vector<32x512xbf16>
    %cst_9 = arith.constant dense<0.000000e+00> : vector<8x512xf32>
    %9 = tpu.matmul %3, %8, %cst_9 {dimension_numbers = #tpu.dot_dimension_numbers<[1], [0], [0], [1], [0, 0, 1, 1], [], []>} : vector<8x32xbf16>, vector<32x512xbf16>, vector<8x512xf32> -> vector<8x512xf32>
    %10 = arith.addf %7, %9 : vector<8x512xf32>
    %c0_10 = arith.constant 0 : index
    %c0_11 = arith.constant 0 : index
    %11 = vector.load %arg7[%c0_10, %c0_11] : memref<1x512xf32, #tpu.memory_space<vmem>>, vector<1x512xf32>
    %12 = vector.broadcast %11 : vector<1x512xf32> to vector<8x512xf32>
    %13 = arith.addf %10, %12 : vector<8x512xf32>
    %c0_12 = arith.constant 0 : index
    %c0_13 = arith.constant 0 : index
    %14 = vector.load %arg5[%c0_12, %c0_13] : memref<32x512xbf16, #tpu.memory_space<vmem>>, vector<32x512xbf16>
    %cst_14 = arith.constant dense<0.000000e+00> : vector<8x512xf32>
    %15 = tpu.matmul %3, %14, %cst_14 {dimension_numbers = #tpu.dot_dimension_numbers<[1], [0], [0], [1], [0, 0, 1, 1], [], []>} : vector<8x32xbf16>, vector<32x512xbf16>, vector<8x512xf32> -> vector<8x512xf32>
    %c0_15 = arith.constant 0 : index
    %c0_16 = arith.constant 0 : index
    %16 = vector.load %arg8[%c0_15, %c0_16] : memref<1x512xf32, #tpu.memory_space<vmem>>, vector<1x512xf32>
    %17 = vector.broadcast %16 : vector<1x512xf32> to vector<8x512xf32>
    %18 = arith.addf %15, %17 : vector<8x512xf32>
    %c0_17 = arith.constant 0 : index
    %c0_18 = arith.constant 0 : index
    %19 = vector.load %arg6[%c0_17, %c0_18] : memref<32x512xbf16, #tpu.memory_space<vmem>>, vector<32x512xbf16>
    %cst_19 = arith.constant dense<0.000000e+00> : vector<8x512xf32>
    %20 = tpu.matmul %5, %19, %cst_19 {dimension_numbers = #tpu.dot_dimension_numbers<[1], [0], [0], [1], [0, 0, 1, 1], [], []>} : vector<8x32xbf16>, vector<32x512xbf16>, vector<8x512xf32> -> vector<8x512xf32>
    %c0_20 = arith.constant 0 : index
    %c0_21 = arith.constant 0 : index
    %21 = vector.load %arg9[%c0_20, %c0_21] : memref<1x512xf32, #tpu.memory_space<vmem>>, vector<1x512xf32>
    %22 = vector.broadcast %21 : vector<1x512xf32> to vector<8x512xf32>
    %23 = arith.addf %20, %22 : vector<8x512xf32>
    %24 = arith.mulf %13, %18 : vector<8x512xf32>
    %25 = arith.mulf %24, %23 : vector<8x512xf32>
    %26 = vector.extract_strided_slice %25 {offsets = [0, 0], sizes = [8, 128], strides = [1, 1]} : vector<8x512xf32> to vector<8x128xf32>
    %27 = vector.extract_strided_slice %25 {offsets = [0, 128], sizes = [8, 128], strides = [1, 1]} : vector<8x512xf32> to vector<8x128xf32>
    %28 = arith.addf %26, %27 : vector<8x128xf32>
    %29 = vector.extract_strided_slice %25 {offsets = [0, 256], sizes = [8, 128], strides = [1, 1]} : vector<8x512xf32> to vector<8x128xf32>
    %30 = arith.addf %28, %29 : vector<8x128xf32>
    %31 = vector.extract_strided_slice %25 {offsets = [0, 384], sizes = [8, 128], strides = [1, 1]} : vector<8x512xf32> to vector<8x128xf32>
    %32 = arith.addf %30, %31 : vector<8x128xf32>
    %c0_22 = arith.constant 0 : index
    %c0_23 = arith.constant 0 : index
    %33 = vector.load %arg10[%c0_22, %c0_23] : memref<1x128xf32, #tpu.memory_space<vmem>>, vector<1x128xf32>
    %34 = vector.broadcast %33 : vector<1x128xf32> to vector<8x128xf32>
    %35 = arith.addf %32, %34 : vector<8x128xf32>
    %36 = arith.cmpf one, %35, %35 : vector<8x128xf32>
    %cst_24 = arith.constant 0.000000e+00 : f32
    %37 = vector.broadcast %cst_24 : f32 to vector<8x128xf32>
    %38 = arith.select %36, %37, %35 : vector<8x128xi1>, vector<8x128xf32>
    %c0_25 = arith.constant 0 : index
    %c0_26 = arith.constant 0 : index
    %39 = vector.load %arg11[%c0_25, %c0_26] : memref<8x128xf32, #tpu.memory_space<vmem>>, vector<8x128xf32>
    tpu.vector_store %arg11[%c0_25, %c0_26], %38 {strides = array<i32>} : memref<8x128xf32, #tpu.memory_space<vmem>>, vector<8x128xf32>,
    return
  }
}

</mosaic_0001>

<llo_original>
// kernel: tpu_custom_call.1
$region0: #{tpu_custom_call.1}
  #allocation0 [shape = 'u32[]', space=smem, size = 0x4, offset = 0x4, fixed_abs, tag = 'smem constant byte address 0x4 - core index']
  #allocation1 [shape = 'u32[144,128]{1,0:T(1,128)}', space=vmem, size = 0x12000, scoped, tag = 'internal scratch']
  %s0 = inlined_call_operand.hbm [shape: f32[8,16], index: 0, kind: input, shape index: {}]
  %s1 = inlined_call_operand.hbm [shape: f32[8,32], index: 1, kind: input, shape index: {}]
  %s2 = inlined_call_operand.hbm [shape: f32[8,32], index: 2, kind: input, shape index: {}]
  %s3 = inlined_call_operand.hbm [shape: bf16[16,512], index: 3, kind: input, shape index: {}]
  %s4 = inlined_call_operand.hbm [shape: bf16[32,512], index: 4, kind: input, shape index: {}]
  %s5 = inlined_call_operand.hbm [shape: bf16[32,512], index: 5, kind: input, shape index: {}]
  %s6 = inlined_call_operand.hbm [shape: bf16[32,512], index: 6, kind: input, shape index: {}]
  %s7 = inlined_call_operand.vmem [shape: f32[1,512], index: 7, kind: input, shape index: {}]
  %s8 = inlined_call_operand.vmem [shape: f32[1,512], index: 8, kind: input, shape index: {}]
  %s9 = inlined_call_operand.vmem [shape: f32[1,512], index: 9, kind: input, shape index: {}]
  %s10 = inlined_call_operand.vmem [shape: f32[1,128], index: 10, kind: input, shape index: {}]
  %s11 = inlined_call_operand.hbm [shape: f32[8,128], index: 11, kind: output, shape index: {}]
  %s12 = sld [smem:[#allocation0]]
  $region82: #{tpu_custom_call.1} parent=0
    _
  %s14 = ssub.s32 1, %s12
  %s15 = scalar_select 0, %s14, %s12
  $region1: #{tpu_custom_call.1} parent=0
    #allocation2 [shape = 'u8[4096]{0}', space=vmem, size = 0x1000, scoped, tag = 'input window, operand 0, single buffered']
    #allocation3 [shape = 's32[1]{0}', space=sflag, size = 0x4, scoped, tag = 'scoped memory for tpu_custom_call.1']
    #allocation4 [shape = 's32[1]{0}', space=sflag, size = 0x4, scoped, tag = 'scoped memory for tpu_custom_call.1']
    #allocation5 [shape = 'u8[4096]{0}', space=vmem, size = 0x1000, scoped, tag = 'input window, operand 1, single buffered']
    #allocation6 [shape = 's32[1]{0}', space=sflag, size = 0x4, scoped, tag = 'scoped memory for tpu_custom_call.1']
    #allocation7 [shape = 'u8[4096]{0}', space=vmem, size = 0x1000, scoped, tag = 'input window, operand 2, single buffered']
    #allocation8 [shape = 'u8[16384]{0}', space=vmem, size = 0x4000, scoped, tag = 'input window, operand 3, single buffered']
    #allocation9 [shape = 's32[1]{0}', space=sflag, size = 0x4, scoped, tag = 'scoped memory for tpu_custom_call.1']
    #allocation10 [shape = 'u8[32768]{0}', space=vmem, size = 0x8000, scoped, tag = 'input window, operand 4, single buffered']
    #allocation11 [shape = 'u8[32768]{0}', space=vmem, size = 0x8000, scoped, tag = 'input window, operand 5, single buffered']
    #allocation12 [shape = 's32[1]{0}', space=sflag, size = 0x4, scoped, tag = 'scoped memory for tpu_custom_call.1']
    #allocation13 [shape = 'u8[32768]{0}', space=vmem, size = 0x8000, scoped, tag = 'input window, operand 6, single buffered']
    #allocation14 [shape = 'u8[4096]{0}', space=vmem, size = 0x1000, scoped, tag = 'output window, operand 0, single buffered']
    %16 = vsyncpa [#allocation3], 0
    %17 = vsyncpa [#allocation6], 0
    %18 = vsyncpa [#allocation9], 0
    %19 = vsyncpa [#allocation12], 0
    %20 = vsyncpa [#allocation4], 0
    // Predicated region
    $region2: #{tpu_custom_call.1} parent=1 // pred_check
      _
    $region3: #{tpu_custom_call.1} parent=1 // pred_check_branch
      %22 = sbr.rel (0) target = $region5
    $region4: #{tpu_custom_call.1} parent=1 // pred_region
      %s24 = ssub.s32 128, 128
      %25 = vsyncadd [#allocation3], %s24
      %s27 = sshll.u32 [#allocation2], 4
      %s28 = int_to_ptr.vmem [resolvable:$true] %s27
      %30 = dma.hbm_to_vmem [thread:$0]  %s0, 128, %s28, [#allocation3]
    $region5: #{tpu_custom_call.1} parent=1 // pred_fallthru
      _
    // Predicated region
    $region6: #{tpu_custom_call.1} parent=1 // pred_check
      _
    $region7: #{tpu_custom_call.1} parent=1 // pred_check_branch
      %32 = sbr.rel (0) target = $region9
    $region8: #{tpu_custom_call.1} parent=1 // pred_region
      %s34 = ssub.s32 128, 128
      %35 = vsyncadd [#allocation6], %s34
      %s37 = sshll.u32 [#allocation5], 4
      %s38 = int_to_ptr.vmem [resolvable:$true] %s37
      %40 = dma.hbm_to_vmem [thread:$0]  %s1, 128, %s38, [#allocation6]
    $region9: #{tpu_custom_call.1} parent=1 // pred_fallthru
      _
    // Predicated region
    $region10: #{tpu_custom_call.1} parent=1 // pred_check
      _
    $region11: #{tpu_custom_call.1} parent=1 // pred_check_branch
      %42 = sbr.rel (0) target = $region13
    $region12: #{tpu_custom_call.1} parent=1 // pred_region
      %s44 = ssub.s32 128, 128
      %45 = vsyncadd [#allocation6], %s44
      %s47 = sshll.u32 [#allocation7], 4
      %s48 = int_to_ptr.vmem [resolvable:$true] %s47
      %50 = dma.hbm_to_vmem [thread:$0]  %s2, 128, %s48, [#allocation6]
    $region13: #{tpu_custom_call.1} parent=1 // pred_fallthru
      _
    // Predicated region
    $region14: #{tpu_custom_call.1} parent=1 // pred_check
      _
    $region15: #{tpu_custom_call.1} parent=1 // pred_check_branch
      %52 = sbr.rel (0) target = $region17
    $region16: #{tpu_custom_call.1} parent=1 // pred_region
      %s54 = ssub.s32 512, 512
      %55 = vsyncadd [#allocation9], %s54
      %s56 = sshll.u32 [#allocation8], 4
      %s57 = int_to_ptr.vmem [resolvable:$true] %s56
      %62 = dma.hbm_to_vmem [thread:$0]  %s3, 512, %s57, [#allocation9], 256, 256, 16
    $region17: #{tpu_custom_call.1} parent=1 // pred_fallthru
      _
    // Predicated region
    $region18: #{tpu_custom_call.1} parent=1 // pred_check
      _
    $region19: #{tpu_custom_call.1} parent=1 // pred_check_branch
      %64 = sbr.rel (0) target = $region21
    $region20: #{tpu_custom_call.1} parent=1 // pred_region
      %s66 = ssub.s32 1024, 1024
      %67 = vsyncadd [#allocation9], %s66
      %s68 = sshll.u32 [#allocation10], 4
      %s69 = int_to_ptr.vmem [resolvable:$true] %s68
      %74 = dma.hbm_to_vmem [thread:$0]  %s4, 1024, %s69, [#allocation9], 256, 256, 16
    $region21: #{tpu_custom_call.1} parent=1 // pred_fallthru
      _
    // Predicated region
    $region22: #{tpu_custom_call.1} parent=1 // pred_check
      _
    $region23: #{tpu_custom_call.1} parent=1 // pred_check_branch
      %76 = sbr.rel (0) target = $region25
    $region24: #{tpu_custom_call.1} parent=1 // pred_region
      %s78 = ssub.s32 1024, 1024
      %79 = vsyncadd [#allocation12], %s78
      %s80 = sshll.u32 [#allocation11], 4
      %s81 = int_to_ptr.vmem [resolvable:$true] %s80
      %86 = dma.hbm_to_vmem [thread:$0]  %s5, 1024, %s81, [#allocation12], 256, 256, 16
    $region25: #{tpu_custom_call.1} parent=1 // pred_fallthru
      _
    // Predicated region
    $region26: #{tpu_custom_call.1} parent=1 // pred_check
      _
    $region27: #{tpu_custom_call.1} parent=1 // pred_check_branch
      %88 = sbr.rel (0) target = $region29
    $region28: #{tpu_custom_call.1} parent=1 // pred_region
      %s90 = ssub.s32 1024, 1024
      %91 = vsyncadd [#allocation12], %s90
      %s92 = sshll.u32 [#allocation13], 4
      %s93 = int_to_ptr.vmem [resolvable:$true] %s92
      %98 = dma.hbm_to_vmem [thread:$0]  %s6, 1024, %s93, [#allocation12], 256, 256, 16
    $region29: #{tpu_custom_call.1} parent=1 // pred_fallthru
      _
    // Predicated region
    $region30: #{tpu_custom_call.1} parent=1 // pred_check
      _
    $region31: #{tpu_custom_call.1} parent=1 // pred_check_branch
      %100 = sbr.rel (0) target = $region33
    $region32: #{tpu_custom_call.1} parent=1 // pred_region
      _
    $region33: #{tpu_custom_call.1} parent=1 // pred_fallthru
      _
    // Predicated region
    $region34: #{tpu_custom_call.1} parent=1 // pred_check
      _
    $region35: #{tpu_custom_call.1} parent=1 // pred_check_branch
      %102 = sbr.rel (0) target = $region37
    $region36: #{tpu_custom_call.1} parent=1 // pred_region
      _
    $region37: #{tpu_custom_call.1} parent=1 // pred_fallthru
      _
    // Predicated region
    $region38: #{tpu_custom_call.1} parent=1 // pred_check
      _
    $region39: #{tpu_custom_call.1} parent=1 // pred_check_branch
      %104 = sbr.rel (0) target = $region41
    $region40: #{tpu_custom_call.1} parent=1 // pred_region
      _
    $region41: #{tpu_custom_call.1} parent=1 // pred_fallthru
      _
    // Predicated region
    $region42: #{tpu_custom_call.1} parent=1 // pred_check
      _
    $region43: #{tpu_custom_call.1} parent=1 // pred_check_branch
      %106 = sbr.rel (0) target = $region45
    $region44: #{tpu_custom_call.1} parent=1 // pred_region
      _
    $region45: #{tpu_custom_call.1} parent=1 // pred_fallthru
      _
    // Predicated region
    $region46: #{tpu_custom_call.1} parent=1 // pred_check
      _
    $region47: #{tpu_custom_call.1} parent=1 // pred_check_branch
      %108 = sbr.rel (0) target = $region49
    $region48: #{tpu_custom_call.1} parent=1 // pred_region
      %109 = dma.done [#allocation3], 128
    $region49: #{tpu_custom_call.1} parent=1 // pred_fallthru
      _
    // Predicated region
    $region50: #{tpu_custom_call.1} parent=1 // pred_check
      _
    $region51: #{tpu_custom_call.1} parent=1 // pred_check_branch
      %111 = sbr.rel (0) target = $region53
    $region52: #{tpu_custom_call.1} parent=1 // pred_region
      %112 = dma.done [#allocation6], 128
    $region53: #{tpu_custom_call.1} parent=1 // pred_fallthru
      _
    // Predicated region
    $region54: #{tpu_custom_call.1} parent=1 // pred_check
      _
    $region55: #{tpu_custom_call.1} parent=1 // pred_check_branch
      %114 = sbr.rel (0) target = $region57
    $region56: #{tpu_custom_call.1} parent=1 // pred_region
      %115 = dma.done [#allocation6], 128
    $region57: #{tpu_custom_call.1} parent=1 // pred_fallthru
      _
    // Predicated region
    $region58: #{tpu_custom_call.1} parent=1 // pred_check
      _
    $region59: #{tpu_custom_call.1} parent=1 // pred_check_branch
      %117 = sbr.rel (0) target = $region61
    $region60: #{tpu_custom_call.1} parent=1 // pred_region
      %118 = dma.done [#allocation9], 512
    $region61: #{tpu_custom_call.1} parent=1 // pred_fallthru
      _
    // Predicated region
    $region62: #{tpu_custom_call.1} parent=1 // pred_check
      _
    $region63: #{tpu_custom_call.1} parent=1 // pred_check_branch
      %120 = sbr.rel (0) target = $region65
    $region64: #{tpu_custom_call.1} parent=1 // pred_region
      %121 = dma.done [#allocation9], 1024
    $region65: #{tpu_custom_call.1} parent=1 // pred_fallthru
      _
    // Predicated region
    $region66: #{tpu_custom_call.1} parent=1 // pred_check
      _
    $region67: #{tpu_custom_call.1} parent=1 // pred_check_branch
      %123 = sbr.rel (0) target = $region69
    $region68: #{tpu_custom_call.1} parent=1 // pred_region
      %124 = dma.done [#allocation12], 1024
    $region69: #{tpu_custom_call.1} parent=1 // pred_fallthru
      _
    // Predicated region
    $region70: #{tpu_custom_call.1} parent=1 // pred_check
      _
    $region71: #{tpu_custom_call.1} parent=1 // pred_check_branch
      %126 = sbr.rel (0) target = $region73
    $region72: #{tpu_custom_call.1} parent=1 // pred_region
      %127 = dma.done [#allocation12], 1024
    $region73: #{tpu_custom_call.1} parent=1 // pred_fallthru
      _
    %v129 = vld [vmem:[#allocation2] sm:$0xff]
    %v130 = vpack.c.bf16 %v129, %v129
    %v131 = vld [vmem:[#allocation5] sm:$0xff]
    %v132 = vpack.c.bf16 %v131, %v131
    %v133 = vld [vmem:[#allocation7] sm:$0xff]
    %v134 = vpack.c.bf16 %v133, %v133
    %v135 = vld [vmem:[#allocation8] sm:$0xff]
    %v136 = vld [vmem:[#allocation8 + $0x8] sm:$0xff]
    %v137 = vld [vmem:[#allocation8 + $0x10] sm:$0xff]
    %v138 = vld [vmem:[#allocation8 + $0x18] sm:$0xff]
    %v139 = vld [vmem:[#allocation10] sm:$0xff]
    %v140 = vld [vmem:[#allocation10 + $0x8] sm:$0xff]
    %v141 = vld [vmem:[#allocation10 + $0x10] sm:$0xff]
    %v142 = vld [vmem:[#allocation10 + $0x18] sm:$0xff]
    %v143 = vld [vmem:[#allocation10 + $0x20] sm:$0xff]
    %v144 = vld [vmem:[#allocation10 + $0x28] sm:$0xff]
    %v145 = vld [vmem:[#allocation10 + $0x30] sm:$0xff]
    %v146 = vld [vmem:[#allocation10 + $0x38] sm:$0xff]
    %v155 = vunpack.c.l.b16 %v139
    %v156 = vunpack.c.h.b16 %v139
    %v157 = vunpack.c.l.b16 %v140
    %v158 = vunpack.c.h.b16 %v140
    %v159 = vunpack.c.l.b16 %v141
    %v160 = vunpack.c.h.b16 %v141
    %v161 = vunpack.c.l.b16 %v142
    %v162 = vunpack.c.h.b16 %v142
    %v163 = vunpack.c.l.b16 %v143
    %v164 = vunpack.c.h.b16 %v143
    %v165 = vunpack.c.l.b16 %v144
    %v166 = vunpack.c.h.b16 %v144
    %v167 = vunpack.c.l.b16 %v145
    %v168 = vunpack.c.h.b16 %v145
    %v169 = vunpack.c.l.b16 %v146
    %v170 = vunpack.c.h.b16 %v146
    %v171 = vpack.c.b16 %v159, %v155
    %v172 = vpack.c.b16 %v160, %v156
    %v173 = vpack.c.b16 %v161, %v157
    %v174 = vpack.c.b16 %v162, %v158
    %v175 = vpack.c.b16 %v167, %v163
    %v176 = vpack.c.b16 %v168, %v164
    %v177 = vpack.c.b16 %v169, %v165
    %v178 = vpack.c.b16 %v170, %v166
    %vm187 = vcmask 261120
    %v189 = vsel %vm187, %v132, 0
    %191 = vmatprep.subr.bf16.mxu0 %v172
    %192 = vmatpush1.bf16.msra.mxu0 %v171
    %193 = vmatprep.subr.bf16.mxu0 %v176
    %194 = vmatpush1.bf16.msra.mxu0 %v175
    %195 = vmatprep.subr.bf16.mxu0 0
    %196 = vmatpush1.bf16.msra.mxu0 0
    %197 = vmatprep.subr.bf16.mxu0 0
    %198 = vmatpush1.bf16.msra.mxu0 0
    %199 = vmatprep.subr.bf16.mxu0 0
    %200 = vmatpush1.bf16.msra.mxu0 0
    %201 = vmatprep.subr.bf16.mxu0 0
    %202 = vmatpush1.bf16.msra.mxu0 0
    %203 = vmatprep.subr.bf16.mxu0 0
    %204 = vmatpush1.bf16.msra.mxu0 0
    %205 = vmatprep.subr.bf16.mxu0 0
    %206 = vmatpush1.bf16.msra.mxu0 0
    %207 = vmatprep.subr.bf16.mxu0 0
    %208 = vmatpush1.bf16.msra.mxu0 0
    %209 = vmatprep.subr.bf16.mxu0 0
    %210 = vmatpush1.bf16.msra.mxu0 0
    %211 = vmatprep.subr.bf16.mxu0 0
    %212 = vmatpush1.bf16.msra.mxu0 0
    %213 = vmatprep.subr.bf16.mxu0 0
    %214 = vmatpush1.bf16.msra.mxu0 0
    %215 = vmatprep.subr.bf16.mxu0 0
    %216 = vmatpush1.bf16.msra.mxu0 0
    %217 = vmatprep.subr.bf16.mxu0 0
    %218 = vmatpush1.bf16.msra.mxu0 0
    %219 = vmatprep.subr.bf16.mxu0 0
    %220 = vmatpush1.bf16.msra.mxu0 0
    %221 = vmatprep.subr.bf16.mxu0 0
    %222 = vmatpush1.bf16.msra.mxu0 0
    %223 = vmatprep.mubr.bf16.mxu0 0
    %224 = vmatmul.mubr.bf16.gmra.mrb[0].mxu0 %v189
    %v225 = vpop.f32.mrb[0].mxu0
    %v226 = vadd.f32 0.0, %v225
    %v227 = vpop.f32.mrb[0].mxu0
    %v228 = vadd.f32 0.0, %v227
    %v229 = vpop.f32.mrb[0].mxu0
    %v230 = vpop.f32.mrb[0].mxu0
    %231 = vdwg.mxu0
    %232 = vmatprep.subr.bf16.mxu0 %v174
    %233 = vmatpush1.bf16.msra.mxu0 %v173
    %234 = vmatprep.subr.bf16.mxu0 %v178
    %235 = vmatpush1.bf16.msra.mxu0 %v177
    %236 = vmatprep.subr.bf16.mxu0 0
    %237 = vmatpush1.bf16.msra.mxu0 0
    %238 = vmatprep.subr.bf16.mxu0 0
    %239 = vmatpush1.bf16.msra.mxu0 0
    %240 = vmatprep.subr.bf16.mxu0 0
    %241 = vmatpush1.bf16.msra.mxu0 0
    %242 = vmatprep.subr.bf16.mxu0 0
    %243 = vmatpush1.bf16.msra.mxu0 0
    %244 = vmatprep.subr.bf16.mxu0 0
    %245 = vmatpush1.bf16.msra.mxu0 0
    %246 = vmatprep.subr.bf16.mxu0 0
    %247 = vmatpush1.bf16.msra.mxu0 0
    %248 = vmatprep.subr.bf16.mxu0 0
    %249 = vmatpush1.bf16.msra.mxu0 0
    %250 = vmatprep.subr.bf16.mxu0 0
    %251 = vmatpush1.bf16.msra.mxu0 0
    %252 = vmatprep.subr.bf16.mxu0 0
    %253 = vmatpush1.bf16.msra.mxu0 0
    %254 = vmatprep.subr.bf16.mxu0 0
    %255 = vmatpush1.bf16.msra.mxu0 0
    %256 = vmatprep.subr.bf16.mxu0 0
    %257 = vmatpush1.bf16.msra.mxu0 0
    %258 = vmatprep.subr.bf16.mxu0 0
    %259 = vmatpush1.bf16.msra.mxu0 0
    %260 = vmatprep.subr.bf16.mxu0 0
    %261 = vmatpush1.bf16.msra.mxu0 0
    %262 = vmatprep.subr.bf16.mxu0 0
    %263 = vmatpush1.bf16.msra.mxu0 0
    %264 = vmatprep.mubr.bf16.mxu0 0
    %265 = vmatmul.mubr.bf16.gmra.mrb[0].mxu0 %v189
    %v266 = vpop.f32.mrb[0].mxu0
    %v267 = vadd.f32 0.0, %v266
    %v268 = vpop.f32.mrb[0].mxu0
    %v269 = vadd.f32 0.0, %v268
    %v270 = vpop.f32.mrb[0].mxu0
    %v271 = vpop.f32.mrb[0].mxu0
    %272 = vdwg.mxu0
    %v277 = vunpack.c.l.b16 %v135
    %v278 = vunpack.c.h.b16 %v135
    %v279 = vunpack.c.l.b16 %v136
    %v280 = vunpack.c.h.b16 %v136
    %v281 = vunpack.c.l.b16 %v137
    %v282 = vunpack.c.h.b16 %v137
    %v283 = vunpack.c.l.b16 %v138
    %v284 = vunpack.c.h.b16 %v138
    %v285 = vpack.c.b16 %v281, %v277
    %v286 = vpack.c.b16 %v282, %v278
    %v287 = vpack.c.b16 %v283, %v279
    %v288 = vpack.c.b16 %v284, %v280
    %vm293 = vcmask 130048
    %v295 = vsel %vm293, %v130, 0
    %297 = vmatprep.subr.bf16.mxu0 %v286
    %298 = vmatpush1.bf16.msra.mxu0 %v285
    %299 = vmatprep.subr.bf16.mxu0 0
    %300 = vmatpush1.bf16.msra.mxu0 0
    %301 = vmatprep.subr.bf16.mxu0 0
    %302 = vmatpush1.bf16.msra.mxu0 0
    %303 = vmatprep.subr.bf16.mxu0 0
    %304 = vmatpush1.bf16.msra.mxu0 0
    %305 = vmatprep.subr.bf16.mxu0 0
    %306 = vmatpush1.bf16.msra.mxu0 0
    %307 = vmatprep.subr.bf16.mxu0 0
    %308 = vmatpush1.bf16.msra.mxu0 0
    %309 = vmatprep.subr.bf16.mxu0 0
    %310 = vmatpush1.bf16.msra.mxu0 0
    %311 = vmatprep.subr.bf16.mxu0 0
    %312 = vmatpush1.bf16.msra.mxu0 0
    %313 = vmatprep.subr.bf16.mxu0 0
    %314 = vmatpush1.bf16.msra.mxu0 0
    %315 = vmatprep.subr.bf16.mxu0 0
    %316 = vmatpush1.bf16.msra.mxu0 0
    %317 = vmatprep.subr.bf16.mxu0 0
    %318 = vmatpush1.bf16.msra.mxu0 0
    %319 = vmatprep.subr.bf16.mxu0 0
    %320 = vmatpush1.bf16.msra.mxu0 0
    %321 = vmatprep.subr.bf16.mxu0 0
    %322 = vmatpush1.bf16.msra.mxu0 0
    %323 = vmatprep.subr.bf16.mxu0 0
    %324 = vmatpush1.bf16.msra.mxu0 0
    %325 = vmatprep.subr.bf16.mxu0 0
    %326 = vmatpush1.bf16.msra.mxu0 0
    %327 = vmatprep.subr.bf16.mxu0 0
    %328 = vmatpush1.bf16.msra.mxu0 0
    %329 = vmatprep.mubr.bf16.mxu0 0
    %330 = vmatmul.mubr.bf16.gmra.mrb[0].mxu0 %v295
    %v331 = vpop.f32.mrb[0].mxu0
    %v332 = vadd.f32 %v226, %v331
    %v333 = vpop.f32.mrb[0].mxu0
    %v334 = vadd.f32 %v228, %v333
    %v335 = vpop.f32.mrb[0].mxu0
    %v336 = vpop.f32.mrb[0].mxu0
    %337 = vdwg.mxu0
    %338 = vmatprep.subr.bf16.mxu0 %v288
    %339 = vmatpush1.bf16.msra.mxu0 %v287
    %340 = vmatprep.subr.bf16.mxu0 0
    %341 = vmatpush1.bf16.msra.mxu0 0
    %342 = vmatprep.subr.bf16.mxu0 0
    %343 = vmatpush1.bf16.msra.mxu0 0
    %344 = vmatprep.subr.bf16.mxu0 0
    %345 = vmatpush1.bf16.msra.mxu0 0
    %346 = vmatprep.subr.bf16.mxu0 0
    %347 = vmatpush1.bf16.msra.mxu0 0
    %348 = vmatprep.subr.bf16.mxu0 0
    %349 = vmatpush1.bf16.msra.mxu0 0
    %350 = vmatprep.subr.bf16.mxu0 0
    %351 = vmatpush1.bf16.msra.mxu0 0
    %352 = vmatprep.subr.bf16.mxu0 0
    %353 = vmatpush1.bf16.msra.mxu0 0
    %354 = vmatprep.subr.bf16.mxu0 0
    %355 = vmatpush1.bf16.msra.mxu0 0
    %356 = vmatprep.subr.bf16.mxu0 0
    %357 = vmatpush1.bf16.msra.mxu0 0
    %358 = vmatprep.subr.bf16.mxu0 0
    %359 = vmatpush1.bf16.msra.mxu0 0
    %360 = vmatprep.subr.bf16.mxu0 0
    %361 = vmatpush1.bf16.msra.mxu0 0
    %362 = vmatprep.subr.bf16.mxu0 0
    %363 = vmatpush1.bf16.msra.mxu0 0
    %364 = vmatprep.subr.bf16.mxu0 0
    %365 = vmatpush1.bf16.msra.mxu0 0
    %366 = vmatprep.subr.bf16.mxu0 0
    %367 = vmatpush1.bf16.msra.mxu0 0
    %368 = vmatprep.subr.bf16.mxu0 0
    %369 = vmatpush1.bf16.msra.mxu0 0
    %370 = vmatprep.mubr.bf16.mxu0 0
    %371 = vmatmul.mubr.bf16.gmra.mrb[0].mxu0 %v295
    %v372 = vpop.f32.mrb[0].mxu0
    %v373 = vadd.f32 %v267, %v372
    %v374 = vpop.f32.mrb[0].mxu0
    %v375 = vadd.f32 %v269, %v374
    %v376 = vpop.f32.mrb[0].mxu0
    %v377 = vpop.f32.mrb[0].mxu0
    %378 = vdwg.mxu0
    %v379 = vld [vmem:[%s7] sm:$0xf]
    %v381 = vlaneseq
    %v382 = vshrl.u32 %v381, 7
    %v383 = vsub.s32 0, %v382
    %v384 = vrot.slane %v379, %v383
    %v385 = vlaneseq
    %v386 = vshrl.u32 %v385, 7
    %v387 = vsub.s32 1, %v386
    %v388 = vrot.slane %v379, %v387
    %v389 = vlaneseq
    %v390 = vshrl.u32 %v389, 7
    %v391 = vsub.s32 2, %v390
    %v392 = vrot.slane %v379, %v391
    %v393 = vlaneseq
    %v394 = vshrl.u32 %v393, 7
    %v395 = vsub.s32 3, %v394
    %v396 = vrot.slane %v379, %v395
    %v401 = vadd.f32 %v332, %v384
    %v402 = vadd.f32 %v334, %v388
    %v403 = vadd.f32 %v373, %v392
    %v404 = vadd.f32 %v375, %v396
    %v405 = vld [vmem:[#allocation11] sm:$0xff]
    %v406 = vld [vmem:[#allocation11 + $0x8] sm:$0xff]
    %v407 = vld [vmem:[#allocation11 + $0x10] sm:$0xff]
    %v408 = vld [vmem:[#allocation11 + $0x18] sm:$0xff]
    %v409 = vld [vmem:[#allocation11 + $0x20] sm:$0xff]
    %v410 = vld [vmem:[#allocation11 + $0x28] sm:$0xff]
    %v411 = vld [vmem:[#allocation11 + $0x30] sm:$0xff]
    %v412 = vld [vmem:[#allocation11 + $0x38] sm:$0xff]
    %v413 = vld [vmem:[%s8] sm:$0xf]
    %v415 = vlaneseq
    %v416 = vshrl.u32 %v415, 7
    %v417 = vsub.s32 0, %v416
    %v418 = vrot.slane %v413, %v417
    %v419 = vlaneseq
    %v420 = vshrl.u32 %v419, 7
    %v421 = vsub.s32 1, %v420
    %v422 = vrot.slane %v413, %v421
    %v423 = vlaneseq
    %v424 = vshrl.u32 %v423, 7
    %v425 = vsub.s32 2, %v424
    %v426 = vrot.slane %v413, %v425
    %v427 = vlaneseq
    %v428 = vshrl.u32 %v427, 7
    %v429 = vsub.s32 3, %v428
    %v430 = vrot.slane %v413, %v429
    %v443 = vunpack.c.l.b16 %v405
    %v444 = vunpack.c.h.b16 %v405
    %v445 = vunpack.c.l.b16 %v406
    %v446 = vunpack.c.h.b16 %v406
    %v447 = vunpack.c.l.b16 %v407
    %v448 = vunpack.c.h.b16 %v407
    %v449 = vunpack.c.l.b16 %v408
    %v450 = vunpack.c.h.b16 %v408
    %v451 = vunpack.c.l.b16 %v409
    %v452 = vunpack.c.h.b16 %v409
    %v453 = vunpack.c.l.b16 %v410
    %v454 = vunpack.c.h.b16 %v410
    %v455 = vunpack.c.l.b16 %v411
    %v456 = vunpack.c.h.b16 %v411
    %v457 = vunpack.c.l.b16 %v412
    %v458 = vunpack.c.h.b16 %v412
    %v459 = vpack.c.b16 %v447, %v443
    %v460 = vpack.c.b16 %v448, %v444
    %v461 = vpack.c.b16 %v449, %v445
    %v462 = vpack.c.b16 %v450, %v446
    %v463 = vpack.c.b16 %v455, %v451
    %v464 = vpack.c.b16 %v456, %v452
    %v465 = vpack.c.b16 %v457, %v453
    %v466 = vpack.c.b16 %v458, %v454
    %475 = vmatprep.subr.bf16.mxu0 %v460
    %476 = vmatpush1.bf16.msra.mxu0 %v459
    %477 = vmatprep.subr.bf16.mxu0 %v464
    %478 = vmatpush1.bf16.msra.mxu0 %v463
    %479 = vmatprep.subr.bf16.mxu0 0
    %480 = vmatpush1.bf16.msra.mxu0 0
    %481 = vmatprep.subr.bf16.mxu0 0
    %482 = vmatpush1.bf16.msra.mxu0 0
    %483 = vmatprep.subr.bf16.mxu0 0
    %484 = vmatpush1.bf16.msra.mxu0 0
    %485 = vmatprep.subr.bf16.mxu0 0
    %486 = vmatpush1.bf16.msra.mxu0 0
    %487 = vmatprep.subr.bf16.mxu0 0
    %488 = vmatpush1.bf16.msra.mxu0 0
    %489 = vmatprep.subr.bf16.mxu0 0
    %490 = vmatpush1.bf16.msra.mxu0 0
    %491 = vmatprep.subr.bf16.mxu0 0
    %492 = vmatpush1.bf16.msra.mxu0 0
    %493 = vmatprep.subr.bf16.mxu0 0
    %494 = vmatpush1.bf16.msra.mxu0 0
    %495 = vmatprep.subr.bf16.mxu0 0
    %496 = vmatpush1.bf16.msra.mxu0 0
    %497 = vmatprep.subr.bf16.mxu0 0
    %498 = vmatpush1.bf16.msra.mxu0 0
    %499 = vmatprep.subr.bf16.mxu0 0
    %500 = vmatpush1.bf16.msra.mxu0 0
    %501 = vmatprep.subr.bf16.mxu0 0
    %502 = vmatpush1.bf16.msra.mxu0 0
    %503 = vmatprep.subr.bf16.mxu0 0
    %504 = vmatpush1.bf16.msra.mxu0 0
    %505 = vmatprep.subr.bf16.mxu0 0
    %506 = vmatpush1.bf16.msra.mxu0 0
    %507 = vmatprep.mubr.bf16.mxu0 0
    %508 = vmatmul.mubr.bf16.gmra.mrb[0].mxu0 %v189
    %v509 = vpop.f32.mrb[0].mxu0
    %v510 = vadd.f32 %v418, %v509
    %v511 = vpop.f32.mrb[0].mxu0
    %v512 = vadd.f32 %v422, %v511
    %v513 = vpop.f32.mrb[0].mxu0
    %v514 = vpop.f32.mrb[0].mxu0
    %515 = vdwg.mxu0
    %516 = vmatprep.subr.bf16.mxu0 %v462
    %517 = vmatpush1.bf16.msra.mxu0 %v461
    %518 = vmatprep.subr.bf16.mxu0 %v466
    %519 = vmatpush1.bf16.msra.mxu0 %v465
    %520 = vmatprep.subr.bf16.mxu0 0
    %521 = vmatpush1.bf16.msra.mxu0 0
    %522 = vmatprep.subr.bf16.mxu0 0
    %523 = vmatpush1.bf16.msra.mxu0 0
    %524 = vmatprep.subr.bf16.mxu0 0
    %525 = vmatpush1.bf16.msra.mxu0 0
    %526 = vmatprep.subr.bf16.mxu0 0
    %527 = vmatpush1.bf16.msra.mxu0 0
    %528 = vmatprep.subr.bf16.mxu0 0
    %529 = vmatpush1.bf16.msra.mxu0 0
    %530 = vmatprep.subr.bf16.mxu0 0
    %531 = vmatpush1.bf16.msra.mxu0 0
    %532 = vmatprep.subr.bf16.mxu0 0
    %533 = vmatpush1.bf16.msra.mxu0 0
    %534 = vmatprep.subr.bf16.mxu0 0
    %535 = vmatpush1.bf16.msra.mxu0 0
    %536 = vmatprep.subr.bf16.mxu0 0
    %537 = vmatpush1.bf16.msra.mxu0 0
    %538 = vmatprep.subr.bf16.mxu0 0
    %539 = vmatpush1.bf16.msra.mxu0 0
    %540 = vmatprep.subr.bf16.mxu0 0
    %541 = vmatpush1.bf16.msra.mxu0 0
    %542 = vmatprep.subr.bf16.mxu0 0
    %543 = vmatpush1.bf16.msra.mxu0 0
    %544 = vmatprep.subr.bf16.mxu0 0
    %545 = vmatpush1.bf16.msra.mxu0 0
    %546 = vmatprep.subr.bf16.mxu0 0
    %547 = vmatpush1.bf16.msra.mxu0 0
    %548 = vmatprep.mubr.bf16.mxu0 0
    %549 = vmatmul.mubr.bf16.gmra.mrb[0].mxu0 %v189
    %v550 = vpop.f32.mrb[0].mxu0
    %v551 = vadd.f32 %v426, %v550
    %v552 = vpop.f32.mrb[0].mxu0
    %v553 = vadd.f32 %v430, %v552
    %v554 = vpop.f32.mrb[0].mxu0
    %v555 = vpop.f32.mrb[0].mxu0
    %556 = vdwg.mxu0
    %v557 = vld [vmem:[#allocation13] sm:$0xff]
    %v558 = vld [vmem:[#allocation13 + $0x8] sm:$0xff]
    %v559 = vld [vmem:[#allocation13 + $0x10] sm:$0xff]
    %v560 = vld [vmem:[#allocation13 + $0x18] sm:$0xff]
    %v561 = vld [vmem:[#allocation13 + $0x20] sm:$0xff]
    %v562 = vld [vmem:[#allocation13 + $0x28] sm:$0xff]
    %v563 = vld [vmem:[#allocation13 + $0x30] sm:$0xff]
    %v564 = vld [vmem:[#allocation13 + $0x38] sm:$0xff]
    %v565 = vld [vmem:[%s9] sm:$0xf]
    %v567 = vlaneseq
    %v568 = vshrl.u32 %v567, 7
    %v569 = vsub.s32 0, %v568
    %v570 = vrot.slane %v565, %v569
    %v571 = vlaneseq
    %v572 = vshrl.u32 %v571, 7
    %v573 = vsub.s32 1, %v572
    %v574 = vrot.slane %v565, %v573
    %v575 = vlaneseq
    %v576 = vshrl.u32 %v575, 7
    %v577 = vsub.s32 2, %v576
    %v578 = vrot.slane %v565, %v577
    %v579 = vlaneseq
    %v580 = vshrl.u32 %v579, 7
    %v581 = vsub.s32 3, %v580
    %v582 = vrot.slane %v565, %v581
    %v595 = vunpack.c.l.b16 %v557
    %v596 = vunpack.c.h.b16 %v557
    %v597 = vunpack.c.l.b16 %v558
    %v598 = vunpack.c.h.b16 %v558
    %v599 = vunpack.c.l.b16 %v559
    %v600 = vunpack.c.h.b16 %v559
    %v601 = vunpack.c.l.b16 %v560
    %v602 = vunpack.c.h.b16 %v560
    %v603 = vunpack.c.l.b16 %v561
    %v604 = vunpack.c.h.b16 %v561
    %v605 = vunpack.c.l.b16 %v562
    %v606 = vunpack.c.h.b16 %v562
    %v607 = vunpack.c.l.b16 %v563
    %v608 = vunpack.c.h.b16 %v563
    %v609 = vunpack.c.l.b16 %v564
    %v610 = vunpack.c.h.b16 %v564
    %v611 = vpack.c.b16 %v599, %v595
    %v612 = vpack.c.b16 %v600, %v596
    %v613 = vpack.c.b16 %v601, %v597
    %v614 = vpack.c.b16 %v602, %v598
    %v615 = vpack.c.b16 %v607, %v603
    %v616 = vpack.c.b16 %v608, %v604
    %v617 = vpack.c.b16 %v609, %v605
    %v618 = vpack.c.b16 %v610, %v606
    %v628 = vsel %vm187, %v134, 0
    %630 = vmatprep.subr.bf16.mxu0 %v612
    %631 = vmatpush1.bf16.msra.mxu0 %v611
    %632 = vmatprep.subr.bf16.mxu0 %v616
    %633 = vmatpush1.bf16.msra.mxu0 %v615
    %634 = vmatprep.subr.bf16.mxu0 0
    %635 = vmatpush1.bf16.msra.mxu0 0
    %636 = vmatprep.subr.bf16.mxu0 0
    %637 = vmatpush1.bf16.msra.mxu0 0
    %638 = vmatprep.subr.bf16.mxu0 0
    %639 = vmatpush1.bf16.msra.mxu0 0
    %640 = vmatprep.subr.bf16.mxu0 0
    %641 = vmatpush1.bf16.msra.mxu0 0
    %642 = vmatprep.subr.bf16.mxu0 0
    %643 = vmatpush1.bf16.msra.mxu0 0
    %644 = vmatprep.subr.bf16.mxu0 0
    %645 = vmatpush1.bf16.msra.mxu0 0
    %646 = vmatprep.subr.bf16.mxu0 0
    %647 = vmatpush1.bf16.msra.mxu0 0
    %648 = vmatprep.subr.bf16.mxu0 0
    %649 = vmatpush1.bf16.msra.mxu0 0
    %650 = vmatprep.subr.bf16.mxu0 0
    %651 = vmatpush1.bf16.msra.mxu0 0
    %652 = vmatprep.subr.bf16.mxu0 0
    %653 = vmatpush1.bf16.msra.mxu0 0
    %654 = vmatprep.subr.bf16.mxu0 0
    %655 = vmatpush1.bf16.msra.mxu0 0
    %656 = vmatprep.subr.bf16.mxu0 0
    %657 = vmatpush1.bf16.msra.mxu0 0
    %658 = vmatprep.subr.bf16.mxu0 0
    %659 = vmatpush1.bf16.msra.mxu0 0
    %660 = vmatprep.subr.bf16.mxu0 0
    %661 = vmatpush1.bf16.msra.mxu0 0
    %662 = vmatprep.mubr.bf16.mxu0 0
    %663 = vmatmul.mubr.bf16.gmra.mrb[0].mxu0 %v628
    %v664 = vpop.f32.mrb[0].mxu0
    %v665 = vadd.f32 %v570, %v664
    %v666 = vpop.f32.mrb[0].mxu0
    %v667 = vadd.f32 %v574, %v666
    %v668 = vpop.f32.mrb[0].mxu0
    %v669 = vpop.f32.mrb[0].mxu0
    %670 = vdwg.mxu0
    %671 = vmatprep.subr.bf16.mxu0 %v614
    %672 = vmatpush1.bf16.msra.mxu0 %v613
    %673 = vmatprep.subr.bf16.mxu0 %v618
    %674 = vmatpush1.bf16.msra.mxu0 %v617
    %675 = vmatprep.subr.bf16.mxu0 0
    %676 = vmatpush1.bf16.msra.mxu0 0
    %677 = vmatprep.subr.bf16.mxu0 0
    %678 = vmatpush1.bf16.msra.mxu0 0
    %679 = vmatprep.subr.bf16.mxu0 0
    %680 = vmatpush1.bf16.msra.mxu0 0
    %681 = vmatprep.subr.bf16.mxu0 0
    %682 = vmatpush1.bf16.msra.mxu0 0
    %683 = vmatprep.subr.bf16.mxu0 0
    %684 = vmatpush1.bf16.msra.mxu0 0
    %685 = vmatprep.subr.bf16.mxu0 0
    %686 = vmatpush1.bf16.msra.mxu0 0
    %687 = vmatprep.subr.bf16.mxu0 0
    %688 = vmatpush1.bf16.msra.mxu0 0
    %689 = vmatprep.subr.bf16.mxu0 0
    %690 = vmatpush1.bf16.msra.mxu0 0
    %691 = vmatprep.subr.bf16.mxu0 0
    %692 = vmatpush1.bf16.msra.mxu0 0
    %693 = vmatprep.subr.bf16.mxu0 0
    %694 = vmatpush1.bf16.msra.mxu0 0
    %695 = vmatprep.subr.bf16.mxu0 0
    %696 = vmatpush1.bf16.msra.mxu0 0
    %697 = vmatprep.subr.bf16.mxu0 0
    %698 = vmatpush1.bf16.msra.mxu0 0
    %699 = vmatprep.subr.bf16.mxu0 0
    %700 = vmatpush1.bf16.msra.mxu0 0
    %701 = vmatprep.subr.bf16.mxu0 0
    %702 = vmatpush1.bf16.msra.mxu0 0
    %703 = vmatprep.mubr.bf16.mxu0 0
    %704 = vmatmul.mubr.bf16.gmra.mrb[0].mxu0 %v628
    %v705 = vpop.f32.mrb[0].mxu0
    %v706 = vadd.f32 %v578, %v705
    %v707 = vpop.f32.mrb[0].mxu0
    %v708 = vadd.f32 %v582, %v707
    %v709 = vpop.f32.mrb[0].mxu0
    %v710 = vpop.f32.mrb[0].mxu0
    %711 = vdwg.mxu0
    %v712 = vmul.f32 %v401, %v510
    %v713 = vmul.f32 %v402, %v512
    %v714 = vmul.f32 %v403, %v551
    %v715 = vmul.f32 %v404, %v553
    %v716 = vmul.f32 %v712, %v665
    %v717 = vmul.f32 %v713, %v667
    %v718 = vmul.f32 %v714, %v706
    %v719 = vmul.f32 %v715, %v708
    %v720 = vadd.f32 %v716, %v717
    %v721 = vadd.f32 %v720, %v718
    %v722 = vadd.f32 %v721, %v719
    %v723 = vld [vmem:[%s10] sm:$0x1]
    %v725 = vlaneseq
    %v726 = vshrl.u32 %v725, 7
    %v727 = vsub.s32 0, %v726
    %v728 = vrot.slane %v723, %v727
    %v730 = vadd.f32 %v722, %v728
    %vm731 = vcmp.ne.f32.partialorder %v730, %v730
    %v732 = vsel %vm731, 0.0, %v730
    %733 = vst [vmem:[#allocation14] sm:$0xff] %v732
    // Predicated region
    $region74: #{tpu_custom_call.1} parent=1 // pred_check
      _
    $region75: #{tpu_custom_call.1} parent=1 // pred_check_branch
      %735 = sbr.rel (0) target = $region77
    $region76: #{tpu_custom_call.1} parent=1 // pred_region
      %s737 = ssub.s32 128, 128
      %738 = vsyncadd [#allocation4], %s737
      %s740 = sshll.u32 [#allocation14], 4
      %s741 = int_to_ptr.vmem [resolvable:$true] %s740
      %743 = dma.vmem_to_hbm [thread:$0]  %s741, 128, %s11, [#allocation4]
    $region77: #{tpu_custom_call.1} parent=1 // pred_fallthru
      _
    // Predicated region
    $region78: #{tpu_custom_call.1} parent=1 // pred_check
      _
    $region79: #{tpu_custom_call.1} parent=1 // pred_check_branch
      %745 = sbr.rel (0) target = $region81
    $region80: #{tpu_custom_call.1} parent=1 // pred_region
      %746 = dma.done [#allocation4], 128
    $region81: #{tpu_custom_call.1} parent=1 // pred_fallthru
      _
    %747 = vsyncpa [#allocation3], 1
    %748 = vsyncpa [#allocation6], 1
    %749 = vsyncpa [#allocation9], 1
    %750 = vsyncpa [#allocation12], 1
    %751 = vsyncpa [#allocation4], 1

</llo_original>
